<compile_context>
chip_gen: v5e
topology: v5e:2x2
jax: 0.10.0
libtpu: 0.0.40
codegen_flags: <defaults>
</compile_context>

<pallas_src>
import jax
import jax.numpy as jnp
from jax.experimental import pallas as pl
from jax.experimental.pallas import tpu as pltpu


def _pick_vt(V, cap):
    """Vocab tile: multiple of 128 (or the full V), <= cap; prefers exact divisors."""
    cap = max(128, (cap // 128) * 128)
    if V <= cap:
        return V                       # whole vocab in one block (full dim always legal)
    lo = max(cap // 2, 128)
    for cand in range(cap, lo - 1, -128):   # exact divisor -> no ragged masking cost
        if V % cand == 0:
            return cand
    return cap                         # ragged trailing V block, masked in-kernel


def _pick_tiles(S, B, V, itemsize, tile_budget):
    """Choose (St, Bt, Vt) respecting the TPU (8, 128) block constraints.

    logits  (St, Bt, Vt): Bt % 8 == 0 or Bt == B ; Vt % 128 == 0 or Vt == V
    targets (St, Bt)    : St % 8 == 0 or St == S ; Bt % 128 == 0 or Bt == B
    out/vlen (1, Bt)    : Bt % 128 == 0 or Bt == B
    Ragged trailing S and V blocks are handled in-kernel.
    """
    bt = 128 if (B >= 128 and B % 128 == 0) else B
    st_min = 8 if S >= 8 else S
    vt_cap = max(128, tile_budget // max(1, st_min * bt * itemsize))
    vt = _pick_vt(V, min(8192, vt_cap))
    st = tile_budget // max(1, bt * vt * itemsize)
    st = max(st_min, min(st, S))
    if S >= 8:
        st = max(8, (st // 8) * 8)
    return st, bt, vt


def sequence_length_cross_entropy_loss(inputs, targets, valid_lengths, *,
                                       st=None, bt=None, vt=None,
                                       tile_budget=8 * 1024 * 1024):
    """inputs: (S, B, V); targets: (B, S) int; valid_lengths: (B,) int -> (B,) f32."""
    S, B, V = inputs.shape
    itemsize = jnp.dtype(inputs.dtype).itemsize
    d_st, d_bt, d_vt = _pick_tiles(S, B, V, itemsize, tile_budget)
    st = d_st if st is None else st
    bt = d_bt if bt is None else bt
    vt = d_vt if vt is None else vt

    nb = pl.cdiv(B, bt)
    ns = pl.cdiv(S, st)
    nv = pl.cdiv(V, vt)

    # Split the S axis across a leading "parallel" axis so the second TensorCore
    # (v7x) gets work even when there is only one batch tile.
    cs = 2 if (nb == 1 and ns >= 2) else 1
    ns_c = pl.cdiv(ns, cs)

    ragged_v = (V % vt) != 0           # static: generate lane masking only if needed

    # targets in (S, B) layout (sublane = seq, lane = batch); V-times smaller
    # than the logits, so this transpose is negligible HBM traffic.
    tgt = jnp.transpose(targets.astype(jnp.int32))            # (S, B)
    vlen = valid_lengths.astype(jnp.int32).reshape(1, B)       # (1, B)

    # Scalar-prefetched per-batch-tile "number of S blocks containing any valid
    # token": gates compute of fully padded tiles and clamps their logits DMA.
    vl_pad = jnp.pad(valid_lengths.astype(jnp.int32), (0, nb * bt - B))
    vmax = jnp.max(vl_pad.reshape(nb, bt), axis=1)
    nact = ((vmax + (st - 1)) // st).astype(jnp.int32)         # (nb,)

    def kernel(nact_ref, logits_ref, tgt_ref, vlen_ref, out_ref, m_sc, l_sc, p_sc):
        c_idx = pl.program_id(0)
        b_idx = pl.program_id(1)
        s_idx = pl.program_id(2)
        v_idx = pl.program_id(3)
        last_v = pl.num_programs(3) - 1

        gs = c_idx * ns_c + s_idx                 # global S-block index
        active = gs < nact_ref[b_idx]             # any valid token in this S tile?

        # fresh per-(core-split, batch-tile) accumulator; the output block is
        # resident in VMEM across the s and v grid axes.
        @pl.when(jnp.logical_and(s_idx == 0, v_idx == 0))
        def _():
            out_ref[...] = jnp.zeros_like(out_ref)

        # fresh online-logsumexp state for this (b, s) tile
        @pl.when(jnp.logical_and(active, v_idx == 0))
        def _():
            m_sc[...] = jnp.full(m_sc.shape, -jnp.inf, jnp.float32)
            l_sc[...] = jnp.zeros(l_sc.shape, jnp.float32)
            p_sc[...] = jnp.zeros(p_sc.shape, jnp.float32)

        @pl.when(active)
        def _():
            x = logits_ref[...]                    # (St, Bt, Vt), native dtype
            tgt_t = tgt_ref[...]                   # (St, Bt) int32
            St, Bt, Vt = x.shape

            lane = jax.lax.broadcasted_iota(jnp.int32, (St, Bt, Vt), 2)

            if ragged_v:
                # mask lanes past the end of the vocab (ragged trailing V block)
                v_limit = V - v_idx * Vt           # scalar; >= Vt except last block
                x = jnp.where(lane < v_limit, x, jnp.asarray(-jnp.inf, dtype=x.dtype))

            # online logsumexp over this vocab chunk; max runs in the native
            # dtype, the f32 upcast is folded into the exp argument.
            m_prev = m_sc[...]
            m_new = jnp.maximum(m_prev, jnp.max(x, axis=-1).astype(jnp.float32))
            l_sc[...] = (l_sc[...] * jnp.exp(m_prev - m_new)
                         + jnp.sum(jnp.exp(x.astype(jnp.float32) - m_new[..., None]),
                                   axis=-1))
            m_sc[...] = m_new

            # target-class logit: plain lane iota vs. locally shifted target
            # (the shift is an (St, Bt) op, not an (St, Bt, Vt) one).
            local_tgt = tgt_t - v_idx * Vt
            picked = jnp.where(lane == local_tgt[..., None], x, jnp.zeros((), x.dtype))
            p_sc[...] += jnp.sum(picked, axis=-1).astype(jnp.float32)

        # finalize per-token CE for this S tile and accumulate per-batch sums.
        # NOTE: padded S rows may hold inf/NaN in m/l/p; the jnp.where selects
        # 0.0 for them regardless -- do not replace it with a mask multiply.
        @pl.when(jnp.logical_and(active, v_idx == last_v))
        def _():
            tgt_t = tgt_ref[...]
            St, Bt = tgt_t.shape
            per_tok = (m_sc[...] + jnp.log(l_sc[...])) - p_sc[...]        # (St, Bt)
            per_tok = jnp.where(tgt_t == -100, 0.0, per_tok)              # ignore_index
            s_pos = jax.lax.broadcasted_iota(jnp.int32, (St, Bt), 0) + gs * st
            per_tok = jnp.where(s_pos < vlen_ref[...], per_tok, 0.0)      # length mask
            out_ref[...] += jnp.sum(per_tok, axis=0, keepdims=True)[None]  # (1,1,Bt)

    def _s_block(c, s, b, nact_ref):
        # clamp to the last S block containing any valid token for this batch
        # tile, so fully padded tiles re-use the previous block (DMA suppressed).
        gs = c * ns_c + s
        return jnp.minimum(gs, jnp.maximum(nact_ref[b] - 1, 0))

    grid_spec = pltpu.PrefetchScalarGridSpec(
        num_scalar_prefetch=1,
        grid=(cs, nb, ns_c, nv),
        in_specs=[
            pl.BlockSpec((st, bt, vt),
                         lambda c, b, s, v, nact_ref: (_s_block(c, s, b, nact_ref), b, v)),
            pl.BlockSpec((st, bt),
                         lambda c, b, s, v, nact_ref: (_s_block(c, s, b, nact_ref), b)),
            pl.BlockSpec((1, bt), lambda c, b, s, v, nact_ref: (0, b)),
        ],
        out_specs=pl.BlockSpec((1, 1, bt), lambda c, b, s, v, nact_ref: (c, 0, b)),
        scratch_shapes=[pltpu.VMEM((st, bt), jnp.float32),   # running max  m
                        pltpu.VMEM((st, bt), jnp.float32),   # running sum  l
                        pltpu.VMEM((st, bt), jnp.float32)],  # picked target logit
    )

    logits_tile_bytes = st * bt * vt * itemsize
    need = 2 * (logits_tile_bytes + st * bt * 4 + 2 * bt * 4) + 3 * st * bt * 4
    vmem_limit = int(min(max(need + 2 * st * bt * vt * 4, 24 << 20), 48 << 20))

    out = pl.pallas_call(
        kernel,
        out_shape=jax.ShapeDtypeStruct((cs, 1, B), jnp.float32),
        grid_spec=grid_spec,
        compiler_params=pltpu.CompilerParams(
            dimension_semantics=("parallel", "parallel", "arbitrary", "arbitrary"),
            vmem_limit_bytes=vmem_limit),
    )(nact, inputs, tgt, vlen)

    # masked mean over the FULL sequence length (matches `.mean(dim=1)`)
    return jnp.sum(out, axis=0)[0] * jnp.float32(1.0 / S)


def _reference(inputs, targets, valid_lengths):
    """Pure-JAX reference for verification."""
    logits = jnp.transpose(inputs, (1, 0, 2)).astype(jnp.float32)   # (B, S, V)
    tgt = targets.astype(jnp.int32)
    B, S, V = logits.shape
    logp = jax.nn.log_softmax(logits, axis=-1)
    safe_tgt = jnp.where(tgt == -100, 0, tgt)
    picked = jnp.take_along_axis(logp, safe_tgt[..., None], axis=-1)[..., 0]
    per_tok = jnp.where(tgt == -100, 0.0, -picked)
    mask = (jnp.arange(S)[None, :] < valid_lengths[:, None]).astype(jnp.float32)
    return jnp.mean(per_tok * mask, axis=1)


if __name__ == "__main__":
    key = jax.random.PRNGKey(0)
    SEQ, BATCH, VOCAB = 16, 2, 200    # VOCAB not a multiple of 128 -> ragged-V path

    k1, k2, _ = jax.random.split(key, 3)
    inputs = jax.random.normal(k1, (SEQ, BATCH, VOCAB), dtype=jnp.float32)
    targets = jax.random.randint(k2, (BATCH, SEQ), 0, VOCAB, dtype=jnp.int32)
    targets = targets.at[0, 3].set(-100)                 # exercise ignore_index
    valid_lengths = jnp.array([5, 8], dtype=jnp.int32)   # 2nd S tile fully padded

    ref = _reference(inputs, targets, valid_lengths)

    # 1) forced tiny tiles: multi-tile S with padded-tile skipping, S core-split,
    #    ragged-V masking, and the online logsumexp across V blocks.
    out_small = sequence_length_cross_entropy_loss(
        inputs, targets, valid_lengths, st=8, bt=BATCH, vt=128)
    out_small = jax.block_until_ready(out_small)

    # 2) default (large) tiles.
    out_default = sequence_length_cross_entropy_loss(inputs, targets, valid_lengths)
    out_default = jax.block_until_ready(out_default)

    assert out_small.shape == (BATCH,)
    assert jnp.allclose(out_small, ref, atol=1e-4, rtol=1e-4), (out_small, ref)
    assert jnp.allclose(out_default, ref, atol=1e-4, rtol=1e-4), (out_default, ref)

    print("KERNEL_OK")
</pallas_src>

<mosaic_0001>
module attributes {stable_mosaic.version = 11 : i64} {
  func.func @kernel(%arg0: i32, %arg1: i32, %arg2: i32, %arg3: i32, %arg4: memref<1xi32, #tpu.memory_space<smem>>, %arg5: memref<8x2x128xf32, #tpu.memory_space<vmem>>, %arg6: memref<8x2xi32, #tpu.memory_space<vmem>>, %arg7: memref<1x2xi32, #tpu.memory_space<vmem>>, %arg8: memref<1x1x2xf32, #tpu.memory_space<vmem>>, %arg9: memref<8x2xf32, #tpu.memory_space<vmem>>, %arg10: memref<8x2xf32, #tpu.memory_space<vmem>>, %arg11: memref<8x2xf32, #tpu.memory_space<vmem>>) attributes {dimension_semantics = [#tpu.dimension_semantics<parallel>, #tpu.dimension_semantics<parallel>, #tpu.dimension_semantics<arbitrary>, #tpu.dimension_semantics<arbitrary>], iteration_bounds = array<i64: 2, 1, 1, 2>, scalar_prefetch = 1 : i64, scratch_operands = 3 : i64, tpu.core_type = #tpu.core_type<tc>, window_params = [{transform_indices = @transform_0, window_bounds = array<i64: 8, 2, 128>}, {transform_indices = @transform_1, window_bounds = array<i64: 8, 2>}, {transform_indices = @transform_2, window_bounds = array<i64: 1, 2>}, {transform_indices = @transform_3, window_bounds = array<i64: 1, 1, 2>}]} {
    %c1_i32 = arith.constant 1 : i32
    %0 = arith.muli %arg0, %c1_i32 : i32
    %1 = arith.addi %0, %arg2 : i32
    %2 = arith.index_cast %arg1 : i32 to index
    %3 = memref.load %arg4[%2] : memref<1xi32, #tpu.memory_space<smem>>
    %4 = arith.cmpi slt, %1, %3 : i32
    %c0_i32 = arith.constant 0 : i32
    %5 = arith.cmpi eq, %arg2, %c0_i32 : i32
    %c0_i32_0 = arith.constant 0 : i32
    %6 = arith.cmpi eq, %arg3, %c0_i32_0 : i32
    %7 = arith.andi %5, %6 : i1
    %8 = arith.extui %7 : i1 to i32
    %c0_i32_1 = arith.constant 0 : i32
    %9 = arith.cmpi ne, %8, %c0_i32_1 : i32
    scf.if %9 {
      %cst = arith.constant 0.000000e+00 : f32
      %20 = vector.broadcast %cst : f32 to vector<1x1x2xf32>
      %c0 = arith.constant 0 : index
      %c0_7 = arith.constant 0 : index
      %c0_8 = arith.constant 0 : index
      %21 = vector.load %arg8[%c0, %c0_7, %c0_8] : memref<1x1x2xf32, #tpu.memory_space<vmem>>, vector<1x1x2xf32>
      tpu.vector_store %arg8[%c0, %c0_7, %c0_8], %20 {strides = array<i32>} : memref<1x1x2xf32, #tpu.memory_space<vmem>>, vector<1x1x2xf32>,
    } else {
    }
    %c0_i32_2 = arith.constant 0 : i32
    %10 = arith.cmpi eq, %arg3, %c0_i32_2 : i32
    %11 = arith.andi %4, %10 : i1
    %12 = arith.extui %11 : i1 to i32
    %c0_i32_3 = arith.constant 0 : i32
    %13 = arith.cmpi ne, %12, %c0_i32_3 : i32
    scf.if %13 {
      %cst = arith.constant 0xFF800000 : f32
      %20 = vector.broadcast %cst : f32 to vector<8x2xf32>
      %c0 = arith.constant 0 : index
      %c0_7 = arith.constant 0 : index
      %21 = vector.load %arg9[%c0, %c0_7] : memref<8x2xf32, #tpu.memory_space<vmem>>, vector<8x2xf32>
      tpu.vector_store %arg9[%c0, %c0_7], %20 {strides = array<i32>} : memref<8x2xf32, #tpu.memory_space<vmem>>, vector<8x2xf32>,
      %cst_8 = arith.constant 0.000000e+00 : f32
      %22 = vector.broadcast %cst_8 : f32 to vector<8x2xf32>
      %c0_9 = arith.constant 0 : index
      %c0_10 = arith.constant 0 : index
      %23 = vector.load %arg10[%c0_9, %c0_10] : memref<8x2xf32, #tpu.memory_space<vmem>>, vector<8x2xf32>
      tpu.vector_store %arg10[%c0_9, %c0_10], %22 {strides = array<i32>} : memref<8x2xf32, #tpu.memory_space<vmem>>, vector<8x2xf32>,
      %cst_11 = arith.constant 0.000000e+00 : f32
      %24 = vector.broadcast %cst_11 : f32 to vector<8x2xf32>
      %c0_12 = arith.constant 0 : index
      %c0_13 = arith.constant 0 : index
      %25 = vector.load %arg11[%c0_12, %c0_13] : memref<8x2xf32, #tpu.memory_space<vmem>>, vector<8x2xf32>
      tpu.vector_store %arg11[%c0_12, %c0_13], %24 {strides = array<i32>} : memref<8x2xf32, #tpu.memory_space<vmem>>, vector<8x2xf32>,
    } else {
    }
    %14 = arith.extui %4 : i1 to i32
    %c0_i32_4 = arith.constant 0 : i32
    %15 = arith.cmpi ne, %14, %c0_i32_4 : i32
    scf.if %15 {
      %c0 = arith.constant 0 : index
      %c0_7 = arith.constant 0 : index
      %c0_8 = arith.constant 0 : index
      %20 = vector.load %arg5[%c0, %c0_7, %c0_8] : memref<8x2x128xf32, #tpu.memory_space<vmem>>, vector<8x2x128xf32>
      %c0_9 = arith.constant 0 : index
      %c0_10 = arith.constant 0 : index
      %21 = vector.load %arg6[%c0_9, %c0_10] : memref<8x2xi32, #tpu.memory_space<vmem>>, vector<8x2xi32>
      %22 = tpu.iota {dimensions = array<i32: 2>} : vector<8x2x128xi32>
      %c128_i32 = arith.constant 128 : i32
      %23 = arith.muli %arg3, %c128_i32 : i32
      %c200_i32 = arith.constant 200 : i32
      %24 = arith.subi %c200_i32, %23 : i32
      %25 = vector.broadcast %24 : i32 to vector<8x2x128xi32>
      %26 = arith.cmpi slt, %22, %25 : vector<8x2x128xi32>
      %cst = arith.constant 0xFF800000 : f32
      %27 = vector.broadcast %cst : f32 to vector<8x2x128xf32>
      %28 = arith.select %26, %20, %27 : vector<8x2x128xi1>, vector<8x2x128xf32>
      %c0_11 = arith.constant 0 : index
      %c0_12 = arith.constant 0 : index
      %29 = vector.load %arg9[%c0_11, %c0_12] : memref<8x2xf32, #tpu.memory_space<vmem>>, vector<8x2xf32>
      %cst_13 = arith.constant dense<0xFF800000> : vector<8x2xf32>
      %30 = vector.multi_reduction <maximumf>, %28, %cst_13 [2] : vector<8x2x128xf32> to vector<8x2xf32>
      %31 = arith.maximumf %29, %30 : vector<8x2xf32>
      %c0_14 = arith.constant 0 : index
      %c0_15 = arith.constant 0 : index
      %32 = vector.load %arg10[%c0_14, %c0_15] : memref<8x2xf32, #tpu.memory_space<vmem>>, vector<8x2xf32>
      %33 = arith.subf %29, %31 : vector<8x2xf32>
      %34 = math.exp %33 : vector<8x2xf32>
      %35 = arith.mulf %32, %34 : vector<8x2xf32>
      %36 = vector.shape_cast %31 : vector<8x2xf32> to vector<8x2x1xf32>
      %37 = vector.broadcast %36 : vector<8x2x1xf32> to vector<8x2x128xf32>
      %38 = arith.subf %28, %37 : vector<8x2x128xf32>
      %39 = math.exp %38 : vector<8x2x128xf32>
      %cst_16 = arith.constant dense<0.000000e+00> : vector<8x2xf32>
      %40 = vector.multi_reduction <add>, %39, %cst_16 [2] : vector<8x2x128xf32> to vector<8x2xf32>
      %41 = arith.addf %35, %40 : vector<8x2xf32>
      %c0_17 = arith.constant 0 : index
      %c0_18 = arith.constant 0 : index
      %42 = vector.load %arg10[%c0_17, %c0_18] : memref<8x2xf32, #tpu.memory_space<vmem>>, vector<8x2xf32>
      tpu.vector_store %arg10[%c0_17, %c0_18], %41 {strides = array<i32>} : memref<8x2xf32, #tpu.memory_space<vmem>>, vector<8x2xf32>,
      %c0_19 = arith.constant 0 : index
      %c0_20 = arith.constant 0 : index
      %43 = vector.load %arg9[%c0_19, %c0_20] : memref<8x2xf32, #tpu.memory_space<vmem>>, vector<8x2xf32>
      tpu.vector_store %arg9[%c0_19, %c0_20], %31 {strides = array<i32>} : memref<8x2xf32, #tpu.memory_space<vmem>>, vector<8x2xf32>,
      %c128_i32_21 = arith.constant 128 : i32
      %44 = arith.muli %arg3, %c128_i32_21 : i32
      %45 = vector.broadcast %44 : i32 to vector<8x2xi32>
      %46 = arith.subi %21, %45 : vector<8x2xi32>
      %47 = vector.shape_cast %46 : vector<8x2xi32> to vector<8x2x1xi32>
      %48 = vector.broadcast %47 : vector<8x2x1xi32> to vector<8x2x128xi32>
      %49 = arith.cmpi eq, %22, %48 : vector<8x2x128xi32>
      %cst_22 = arith.constant 0.000000e+00 : f32
      %50 = vector.broadcast %cst_22 : f32 to vector<8x2x128xf32>
      %51 = arith.select %49, %28, %50 : vector<8x2x128xi1>, vector<8x2x128xf32>
      %c0_23 = arith.constant 0 : index
      %c0_24 = arith.constant 0 : index
      %52 = vector.load %arg11[%c0_23, %c0_24] : memref<8x2xf32, #tpu.memory_space<vmem>>, vector<8x2xf32>
      %cst_25 = arith.constant dense<0.000000e+00> : vector<8x2xf32>
      %53 = vector.multi_reduction <add>, %51, %cst_25 [2] : vector<8x2x128xf32> to vector<8x2xf32>
      %54 = arith.addf %52, %53 : vector<8x2xf32>
      %c0_26 = arith.constant 0 : index
      %c0_27 = arith.constant 0 : index
      %55 = vector.load %arg11[%c0_26, %c0_27] : memref<8x2xf32, #tpu.memory_space<vmem>>, vector<8x2xf32>
      tpu.vector_store %arg11[%c0_26, %c0_27], %54 {strides = array<i32>} : memref<8x2xf32, #tpu.memory_space<vmem>>, vector<8x2xf32>,
    } else {
    }
    %c1_i32_5 = arith.constant 1 : i32
    %16 = arith.cmpi eq, %arg3, %c1_i32_5 : i32
    %17 = arith.andi %4, %16 : i1
    %18 = arith.extui %17 : i1 to i32
    %c0_i32_6 = arith.constant 0 : i32
    %19 = arith.cmpi ne, %18, %c0_i32_6 : i32
    scf.if %19 {
      %c0 = arith.constant 0 : index
      %c0_7 = arith.constant 0 : index
      %20 = vector.load %arg6[%c0, %c0_7] : memref<8x2xi32, #tpu.memory_space<vmem>>, vector<8x2xi32>
      %c0_8 = arith.constant 0 : index
      %c0_9 = arith.constant 0 : index
      %21 = vector.load %arg9[%c0_8, %c0_9] : memref<8x2xf32, #tpu.memory_space<vmem>>, vector<8x2xf32>
      %c0_10 = arith.constant 0 : index
      %c0_11 = arith.constant 0 : index
      %22 = vector.load %arg10[%c0_10, %c0_11] : memref<8x2xf32, #tpu.memory_space<vmem>>, vector<8x2xf32>
      %23 = math.log %22 : vector<8x2xf32>
      %24 = arith.addf %21, %23 : vector<8x2xf32>
      %c0_12 = arith.constant 0 : index
      %c0_13 = arith.constant 0 : index
      %25 = vector.load %arg11[%c0_12, %c0_13] : memref<8x2xf32, #tpu.memory_space<vmem>>, vector<8x2xf32>
      %26 = arith.subf %24, %25 : vector<8x2xf32>
      %c-100_i32 = arith.constant -100 : i32
      %27 = vector.broadcast %c-100_i32 : i32 to vector<8x2xi32>
      %28 = arith.cmpi eq, %20, %27 : vector<8x2xi32>
      %cst = arith.constant 0.000000e+00 : f32
      %29 = vector.broadcast %cst : f32 to vector<8x2xf32>
      %30 = arith.select %28, %29, %26 : vector<8x2xi1>, vector<8x2xf32>
      %31 = tpu.iota {dimensions = array<i32: 0>} : vector<8x2xi32>
      %c8_i32 = arith.constant 8 : i32
      %32 = arith.muli %1, %c8_i32 : i32
      %33 = vector.broadcast %32 : i32 to vector<8x2xi32>
      %34 = arith.addi %31, %33 : vector<8x2xi32>
      %c0_14 = arith.constant 0 : index
      %c0_15 = arith.constant 0 : index
      %35 = vector.load %arg7[%c0_14, %c0_15] : memref<1x2xi32, #tpu.memory_space<vmem>>, vector<1x2xi32>
      %36 = vector.broadcast %35 : vector<1x2xi32> to vector<8x2xi32>
      %37 = arith.cmpi slt, %34, %36 : vector<8x2xi32>
      %cst_16 = arith.constant 0.000000e+00 : f32
      %38 = vector.broadcast %cst_16 : f32 to vector<8x2xf32>
      %39 = arith.select %37, %30, %38 : vector<8x2xi1>, vector<8x2xf32>
      %c0_17 = arith.constant 0 : index
      %c0_18 = arith.constant 0 : index
      %c0_19 = arith.constant 0 : index
      %40 = vector.load %arg8[%c0_17, %c0_18, %c0_19] : memref<1x1x2xf32, #tpu.memory_space<vmem>>, vector<1x1x2xf32>
      %cst_20 = arith.constant dense<0.000000e+00> : vector<2xf32>
      %41 = vector.multi_reduction <add>, %39, %cst_20 [0] : vector<8x2xf32> to vector<2xf32>
      %42 = vector.shape_cast %41 : vector<2xf32> to vector<1x2xf32>
      %43 = vector.shape_cast %42 : vector<1x2xf32> to vector<1x1x2xf32>
      %44 = arith.addf %40, %43 : vector<1x1x2xf32>
      %c0_21 = arith.constant 0 : index
      %c0_22 = arith.constant 0 : index
      %c0_23 = arith.constant 0 : index
      %45 = vector.load %arg8[%c0_21, %c0_22, %c0_23] : memref<1x1x2xf32, #tpu.memory_space<vmem>>, vector<1x1x2xf32>
      tpu.vector_store %arg8[%c0_21, %c0_22, %c0_23], %44 {strides = array<i32>} : memref<1x1x2xf32, #tpu.memory_space<vmem>>, vector<1x1x2xf32>,
    } else {
    }
    return
  }
  func.func @transform_0(%arg0: i32, %arg1: i32, %arg2: i32, %arg3: i32, %arg4: memref<1xi32, #tpu.memory_space<smem>>) -> (i32, i32, i32) {
    %c1_i32 = arith.constant 1 : i32
    %0 = arith.muli %arg0, %c1_i32 : i32
    %1 = arith.addi %0, %arg2 : i32
    %2 = arith.index_cast %arg1 : i32 to index
    %3 = memref.load %arg4[%2] : memref<1xi32, #tpu.memory_space<smem>>
    %c1_i32_0 = arith.constant 1 : i32
    %4 = arith.subi %3, %c1_i32_0 : i32
    %c0_i32 = arith.constant 0 : i32
    %5 = arith.maxsi %4, %c0_i32 : i32
    %6 = arith.minsi %1, %5 : i32
    %c0_i32_1 = arith.constant 0 : i32
    return %6, %arg1, %arg3 : i32, i32, i32
  }
  func.func @transform_1(%arg0: i32, %arg1: i32, %arg2: i32, %arg3: i32, %arg4: memref<1xi32, #tpu.memory_space<smem>>) -> (i32, i32) {
    %c1_i32 = arith.constant 1 : i32
    %0 = arith.muli %arg0, %c1_i32 : i32
    %1 = arith.addi %0, %arg2 : i32
    %2 = arith.index_cast %arg1 : i32 to index
    %3 = memref.load %arg4[%2] : memref<1xi32, #tpu.memory_space<smem>>
    %c1_i32_0 = arith.constant 1 : i32
    %4 = arith.subi %3, %c1_i32_0 : i32
    %c0_i32 = arith.constant 0 : i32
    %5 = arith.maxsi %4, %c0_i32 : i32
    %6 = arith.minsi %1, %5 : i32
    %c0_i32_1 = arith.constant 0 : i32
    return %6, %arg1 : i32, i32
  }
  func.func @transform_2(%arg0: i32, %arg1: i32, %arg2: i32, %arg3: i32, %arg4: memref<1xi32, #tpu.memory_space<smem>>) -> (i32, i32) {
    %c0_i32 = arith.constant 0 : i32
    %c0_i32_0 = arith.constant 0 : i32
    return %c0_i32, %arg1 : i32, i32
  }
  func.func @transform_3(%arg0: i32, %arg1: i32, %arg2: i32, %arg3: i32, %arg4: memref<1xi32, #tpu.memory_space<smem>>) -> (i32, i32, i32) {
    %c0_i32 = arith.constant 0 : i32
    %c0_i32_0 = arith.constant 0 : i32
    return %arg0, %c0_i32, %arg1 : i32, i32, i32
  }
}

</mosaic_0001>

<llo_original>
// kernel: tpu_custom_call.1
$region0: #{tpu_custom_call.1}
  #allocation0 [shape = 'u32[]', space=smem, size = 0x4, offset = 0x4, fixed_abs, tag = 'smem constant byte address 0x4 - core index']
  #allocation1 [shape = 'u32[72,128]{1,0:T(1,128)}', space=vmem, size = 0x9000, scoped, tag = 'internal scratch']
  #allocation2 [shape = 'f32[8,2]{1,0:T(8,128)}', space=vmem, size = 0x1000, scoped, tag = 'scratch operand']
  #allocation3 [shape = 'f32[8,2]{1,0:T(8,128)}', space=vmem, size = 0x1000, scoped, tag = 'scratch operand']
  #allocation4 [shape = 'f32[8,2]{1,0:T(8,128)}', space=vmem, size = 0x1000, scoped, tag = 'scratch operand']
  #allocation5 [shape = 's32[1]{0}', space=sflag, size = 0x4, scoped, tag = 'scoped memory for tpu_custom_call.1']
  #allocation6 [shape = 's32[1]{0:T(128)S(6)}', space=smem, size = 0x200, scoped, tag = 'prefetched SMEM operand 0']
  %s0 = inlined_call_operand.<no memory space> [shape: s32[1], index: 0, kind: input, shape index: {}]
  %s1 = inlined_call_operand.hbm [shape: f32[16,2,200], index: 1, kind: input, shape index: {}]
  %s2 = inlined_call_operand.vmem [shape: s32[16,2], index: 2, kind: input, shape index: {}]
  %s3 = inlined_call_operand.vmem [shape: s32[1,2], index: 3, kind: input, shape index: {}]
  %s4 = inlined_call_operand.hbm [shape: f32[2,1,2], index: 4, kind: output, shape index: {}]
  %s5 = sld [smem:[#allocation0]]
  $region65: #{tpu_custom_call.1} parent=0
    _
  %s7 = ssub.s32 1, %s5
  %s8 = scalar_select 0, %s7, %s5
  %9 = sst [smem:[#allocation6]] %s0
  $region1: #{tpu_custom_call.1} parent=0
    #allocation7 [shape = 'u8[16384]{0}', space=vmem, size = 0x4000, scoped, tag = 'input window, operand 1']
    #allocation8 [shape = 's32[2]{0}', space=sflag, size = 0x8, scoped, tag = 'scoped memory for tpu_custom_call.1']
    #allocation9 [shape = 's32[2]{0}', space=sflag, size = 0x8, scoped, tag = 'scoped memory for tpu_custom_call.1']
    #allocation10 [shape = 'u8[1024]{0}', space=vmem, size = 0x400, scoped, tag = 'output window, operand 0']
    %10 = vsyncpa [#allocation8], 0
    %s11 = scalar_lea.sflag [#allocation8], 1
    %12 = vsyncpa %s11, 0
    %13 = vsyncpa [#allocation9], 0
    %s14 = scalar_lea.sflag [#allocation9], 1
    %15 = vsyncpa %s14, 0
    loop: start=0, step=1, limit=6
    $region2: #{tpu_custom_call.1} parent=1 // loop_pre_header
      _
    $region3: #{tpu_custom_call.1} parent=1 // loop_header
      %s17 = sphi 0, %s21
      %p18 = scmp.ge.s32.totalorder %s17, 6
      %s24 = sphi 0, %s50
      %s25 = sphi 0, %s46
      %s26 = sphi 0, %s42
      %s27 = sphi 0, %s38
      %s28 = sphi 0, %s24
      %s29 = sphi 0, %s25
      %s30 = sphi 0, %s26
      %s31 = sphi 0, %s27
      %s32 = sphi 0, %s28
      %s33 = sphi 0, %s29
      %s34 = sphi 0, %s30
      %s35 = sphi 0, %s31
      %s71 = sphi 0, %s73
      %s74 = sphi 0, %s71
      %s75 = sphi 0, %s74
      %s91 = sphi 0, %s75
      %s113 = sphi 0, %s115
      %s116 = sphi 0, %s113
      %s117 = sphi 0, %s116
      %s133 = sphi 0, %s117
      %s139 = sphi 0, %s141
      %s142 = sphi 0, %s139
      %s143 = sphi 0, %s142
      %s159 = sphi 0, %s143
      %s167 = sphi 0, %s169
      %s170 = sphi 0, %s167
      %s171 = sphi 0, %s170
      %s187 = sphi 0, %s171
    $region4: #{tpu_custom_call.1} parent=1 // loop_header_branch
      %20 = sbr.rel (%p18) target = $region8
    $region5: #{tpu_custom_call.1} parent=1 // loop_body
      %s22 = ssub.s32 %s17, 1
      %s23 = ssub.s32 %s17, 2
      %s36 = sadd.s32 1, %s27
      %p37 = scmp.ge.s32.totalorder %s36, 2
      %s38 = scalar_select %p37, 0, %s36
      %s39 = sadd.s32 1, %s26
      %s40 = scalar_select %p37, %s39, %s26
      %p41 = scmp.ge.s32.totalorder %s40, 1
      %s42 = scalar_select %p41, 0, %s40
      %s43 = sadd.s32 1, %s25
      %s44 = scalar_select %p41, %s43, %s25
      %p45 = scmp.ge.s32.totalorder %s44, 1
      %s46 = scalar_select %p45, 0, %s44
      %s47 = sadd.s32 1, %s24
      %s48 = scalar_select %p45, %s47, %s24
      %p49 = scmp.ge.s32.totalorder %s48, 2
      %s50 = scalar_select %p49, 0, %s48
      %s51 = sadd.s32 %s24, %s26
      %s52 = sld [smem:[#allocation6 + %s25]]
      %s53 = ssub.s32 %s52, 1
      %p54 = scmp.gt.s32.totalorder %s53, 0
      %s55 = scalar_select %p54, %s53, 0
      %p56 = scmp.lt.s32.totalorder %s51, %s55
      %s57 = scalar_select %p56, %s51, %s55
      %s58 = sadd.s32 %s50, %s42
      %s59 = sld [smem:[#allocation6 + %s46]]
      %s60 = ssub.s32 %s59, 1
      %p61 = scmp.gt.s32.totalorder %s60, 0
      %s62 = scalar_select %p61, %s60, 0
      %p63 = scmp.lt.s32.totalorder %s58, %s62
      %s64 = scalar_select %p63, %s58, %s62
      %s65 = ssub.s32 %s57, %s64
      %s66 = ssub.s32 %s25, %s46
      %s67 = sor.u32 %s65, %s66
      %s68 = ssub.s32 %s27, %s38
      %s69 = sor.u32 %s67, %s68
      %p70 = scmp.eq.s32.totalorder %s69, 0
      %s72 = sadd.s32 %s71, 1
      %s73 = scalar_select %p70, %s71, %s72
      %p76 = pneg %p70
      %p77 = scmp.eq.s32.totalorder %s17, 3
      %p78 = por %p76, %p77
      %p79 = scmp.ne.s32.totalorder %s71, %s74
      %p80 = scmp.eq.s32.totalorder %s17, 0
      %p81 = por %p79, %p80
      %p82 = scmp.ne.s32.totalorder %s71, %s74
      %p83 = scmp.eq.s32.totalorder %s22, 3
      %p84 = por %p82, %p83
      %p85 = scmp.ne.s32.totalorder %s74, %s75
      %p86 = scmp.eq.s32.totalorder %s22, 0
      %p87 = por %p85, %p86
      %p88 = scmp.ne.s32.totalorder %s74, %s75
      %p89 = scmp.eq.s32.totalorder %s23, 3
      %p90 = por %p88, %p89
      %p92 = scmp.ne.s32.totalorder %s75, %s91
      %p93 = scmp.eq.s32.totalorder %s23, 0
      %p94 = por %p92, %p93
      %s95 = sadd.s32 %s24, %s26
      %s96 = sld [smem:[#allocation6 + %s25]]
      %s97 = ssub.s32 %s96, 1
      %p98 = scmp.gt.s32.totalorder %s97, 0
      %s99 = scalar_select %p98, %s97, 0
      %p100 = scmp.lt.s32.totalorder %s95, %s99
      %s101 = scalar_select %p100, %s95, %s99
      %s102 = sadd.s32 %s50, %s42
      %s103 = sld [smem:[#allocation6 + %s46]]
      %s104 = ssub.s32 %s103, 1
      %p105 = scmp.gt.s32.totalorder %s104, 0
      %s106 = scalar_select %p105, %s104, 0
      %p107 = scmp.lt.s32.totalorder %s102, %s106
      %s108 = scalar_select %p107, %s102, %s106
      %s109 = ssub.s32 %s101, %s108
      %s110 = ssub.s32 %s25, %s46
      %s111 = sor.u32 %s109, %s110
      %p112 = scmp.eq.s32.totalorder %s111, 0
      %s114 = sadd.s32 %s113, 1
      %s115 = scalar_select %p112, %s113, %s114
      %p118 = pneg %p112
      %p119 = scmp.eq.s32.totalorder %s17, 3
      %p120 = por %p118, %p119
      %p121 = scmp.ne.s32.totalorder %s113, %s116
      %p122 = scmp.eq.s32.totalorder %s17, 0
      %p123 = por %p121, %p122
      %p124 = scmp.ne.s32.totalorder %s113, %s116
      %p125 = scmp.eq.s32.totalorder %s22, 3
      %p126 = por %p124, %p125
      %p127 = scmp.ne.s32.totalorder %s116, %s117
      %p128 = scmp.eq.s32.totalorder %s22, 0
      %p129 = por %p127, %p128
      %p130 = scmp.ne.s32.totalorder %s116, %s117
      %p131 = scmp.eq.s32.totalorder %s23, 3
      %p132 = por %p130, %p131
      %p134 = scmp.ne.s32.totalorder %s117, %s133
      %p135 = scmp.eq.s32.totalorder %s23, 0
      %p136 = por %p134, %p135
      %s137 = ssub.s32 %s25, %s46
      %p138 = scmp.eq.s32.totalorder %s137, 0
      %s140 = sadd.s32 %s139, 1
      %s141 = scalar_select %p138, %s139, %s140
      %p144 = pneg %p138
      %p145 = scmp.eq.s32.totalorder %s17, 3
      %p146 = por %p144, %p145
      %p147 = scmp.ne.s32.totalorder %s139, %s142
      %p148 = scmp.eq.s32.totalorder %s17, 0
      %p149 = por %p147, %p148
      %p150 = scmp.ne.s32.totalorder %s139, %s142
      %p151 = scmp.eq.s32.totalorder %s22, 3
      %p152 = por %p150, %p151
      %p153 = scmp.ne.s32.totalorder %s142, %s143
      %p154 = scmp.eq.s32.totalorder %s22, 0
      %p155 = por %p153, %p154
      %p156 = scmp.ne.s32.totalorder %s142, %s143
      %p157 = scmp.eq.s32.totalorder %s23, 3
      %p158 = por %p156, %p157
      %p160 = scmp.ne.s32.totalorder %s143, %s159
      %p161 = scmp.eq.s32.totalorder %s23, 0
      %p162 = por %p160, %p161
      %s163 = ssub.s32 %s24, %s50
      %s164 = ssub.s32 %s25, %s46
      %s165 = sor.u32 %s163, %s164
      %p166 = scmp.eq.s32.totalorder %s165, 0
      %s168 = sadd.s32 %s167, 1
      %s169 = scalar_select %p166, %s167, %s168
      %p172 = pneg %p166
      %p173 = scmp.eq.s32.totalorder %s17, 3
      %p174 = por %p172, %p173
      %p175 = scmp.ne.s32.totalorder %s167, %s170
      %p176 = scmp.eq.s32.totalorder %s17, 0
      %p177 = por %p175, %p176
      %p178 = scmp.ne.s32.totalorder %s167, %s170
      %p179 = scmp.eq.s32.totalorder %s22, 3
      %p180 = por %p178, %p179
      %p181 = scmp.ne.s32.totalorder %s170, %s171
      %p182 = scmp.eq.s32.totalorder %s22, 0
      %p183 = por %p181, %p182
      %p184 = scmp.ne.s32.totalorder %s170, %s171
      %p185 = scmp.eq.s32.totalorder %s23, 3
      %p186 = por %p184, %p185
      %p188 = scmp.ne.s32.totalorder %s171, %s187
      %p189 = scmp.eq.s32.totalorder %s23, 0
      %p190 = por %p188, %p189
      %p191 = scmp.le.s32.totalorder 1, %s17
      %p192 = scmp.lt.s32.totalorder %s17, 5
      %p193 = pnand %p191, %p192
      %p194 = pneg %p193
      // Predicated region
      $region9: #{tpu_custom_call.1} parent=5 // pred_check
        _
      $region10: #{tpu_custom_call.1} parent=5 // pred_check_branch
        %196 = sbr.rel (%p193) target = $region12
      $region11: #{tpu_custom_call.1} parent=5 // pred_region
        %s197 = ssub.s32 %s17, 1
        // Predicated region
        $region13: #{tpu_custom_call.1} parent=11 // pred_check
          %p198 = pneg %p155
        $region14: #{tpu_custom_call.1} parent=11 // pred_check_branch
          %200 = sbr.rel (%p198) target = $region16
        $region15: #{tpu_custom_call.1} parent=11 // pred_region
          %p201 = scmp.lt.s32.totalorder %s29, 0
          %s202 = scalar_select %p201, %s29, 0
          %s203 = scalar_lea.vmem %s3, %s202
        $region16: #{tpu_custom_call.1} parent=11 // pred_fallthru
          _
      $region12: #{tpu_custom_call.1} parent=5 // pred_fallthru
        _
      %p204 = scmp.lt.s32.totalorder %s17, 4
      // Predicated region
      $region17: #{tpu_custom_call.1} parent=5 // pred_check
        %p205 = pneg %p204
      $region18: #{tpu_custom_call.1} parent=5 // pred_check_branch
        %207 = sbr.rel (%p205) target = $region20
      $region19: #{tpu_custom_call.1} parent=5 // pred_region
        // Predicated region
        $region21: #{tpu_custom_call.1} parent=19 // pred_check
          %p208 = pneg %p81
        $region22: #{tpu_custom_call.1} parent=19 // pred_check_branch
          %210 = sbr.rel (%p208) target = $region24
        $region23: #{tpu_custom_call.1} parent=19 // pred_region
          %s211 = sand.u32 %s71, 1
          %s212 = scalar_lea.sflag [#allocation8], %s211
          %s213 = sand.u32 %s71, 1
          %s214 = smul.addr %s213, 16
          %s215 = scalar_lea.vmem [#allocation7], %s214
          %s216 = sadd.s32 %s24, %s26
          %s217 = sld [smem:[#allocation6 + %s25]]
          %s218 = ssub.s32 %s217, 1
          %p219 = scmp.gt.s32.totalorder %s218, 0
          %s220 = scalar_select %p219, %s218, 0
          %p221 = scmp.lt.s32.totalorder %s216, %s220
          %s222 = scalar_select %p221, %s216, %s220
          %s223 = smul.u32 8, %s222
          %225 = vsyncadd %s212, 0
          %s226 = smul.addr %s25, 2
          %s227 = sadd.s32 %s27, %s226
          %s228 = smul.addr %s223, 2
          %s229 = sadd.s32 %s227, %s228
          %s230 = smul.addr %s229, 2
          %s231 = scalar_lea.hbm %s1, %s230
          %s232 = sshll.u32 %s231, 4
          %s233 = int_to_ptr.hbm [resolvable:$true] %s232
          %s234 = sshll.u32 %s215, 4
          %s235 = int_to_ptr.vmem [resolvable:$true] %s234
          %240 = dma.hbm_to_vmem [thread:$0]  %s233, 256, %s235, %s212, 64, 32, 2
        $region24: #{tpu_custom_call.1} parent=19 // pred_fallthru
          _
        // Predicated region
        $region25: #{tpu_custom_call.1} parent=19 // pred_check
          %p241 = pneg %p123
        $region26: #{tpu_custom_call.1} parent=19 // pred_check_branch
          %243 = sbr.rel (%p241) target = $region28
        $region27: #{tpu_custom_call.1} parent=19 // pred_region
          %s244 = sadd.s32 %s24, %s26
          %s245 = sld [smem:[#allocation6 + %s25]]
          %s246 = ssub.s32 %s245, 1
          %p247 = scmp.gt.s32.totalorder %s246, 0
          %s248 = scalar_select %p247, %s246, 0
          %p249 = scmp.lt.s32.totalorder %s244, %s248
          %s250 = scalar_select %p249, %s244, %s248
          %p251 = scmp.lt.s32.totalorder %s250, 1
          %s252 = scalar_select %p251, %s250, 1
          %p253 = scmp.lt.s32.totalorder %s25, 0
          %s254 = scalar_select %p253, %s25, 0
          %s255 = sadd.s32 %s254, %s252
          %s256 = smul.addr %s255, 8
          %s257 = scalar_lea.vmem %s2, %s256
          %s258 = sadd.s32 %s24, %s26
          %s259 = sld [smem:[#allocation6 + %s25]]
          %s260 = ssub.s32 %s259, 1
          %p261 = scmp.gt.s32.totalorder %s260, 0
          %s262 = scalar_select %p261, %s260, 0
          %p263 = scmp.lt.s32.totalorder %s258, %s262
          %s264 = scalar_select %p263, %s258, %s262
        $region28: #{tpu_custom_call.1} parent=19 // pred_fallthru
          _
      $region20: #{tpu_custom_call.1} parent=5 // pred_fallthru
        _
      %p265 = scmp.le.s32.totalorder 1, %s17
      %p266 = scmp.lt.s32.totalorder %s17, 5
      %p267 = pnand %p265, %p266
      %p268 = pneg %p267
      // Predicated region
      $region29: #{tpu_custom_call.1} parent=5 // pred_check
        _
      $region30: #{tpu_custom_call.1} parent=5 // pred_check_branch
        %270 = sbr.rel (%p267) target = $region32
      $region31: #{tpu_custom_call.1} parent=5 // pred_region
        %s271 = ssub.s32 %s17, 1
        %s272 = sand.u32 %s74, 1
        %s273 = scalar_lea.sflag [#allocation8], %s272
        %s274 = sand.u32 %s74, 1
        %s275 = smul.addr %s274, 16
        %s276 = scalar_lea.vmem [#allocation7], %s275
        // Predicated region
        $region33: #{tpu_custom_call.1} parent=31 // pred_check
          %p277 = pneg %p87
        $region34: #{tpu_custom_call.1} parent=31 // pred_check_branch
          %279 = sbr.rel (%p277) target = $region36
        $region35: #{tpu_custom_call.1} parent=31 // pred_region
          %281 = dma.done %s273, 256
        $region36: #{tpu_custom_call.1} parent=31 // pred_fallthru
          _
        %s282 = sand.u32 %s74, 1
        %s283 = scalar_lea.sflag [#allocation8], %s282
        %s284 = sand.u32 %s74, 1
        %s285 = smul.addr %s284, 16
        %s286 = scalar_lea.vmem [#allocation7], %s285
        %p287 = pneg %p87
        %p288 = pneg %p84
        %s289 = sadd.s32 %s28, %s30
        %s290 = sld [smem:[#allocation6 + %s29]]
        %s291 = ssub.s32 %s290, 1
        %p292 = scmp.gt.s32.totalorder %s291, 0
        %s293 = scalar_select %p292, %s291, 0
        %p294 = scmp.lt.s32.totalorder %s289, %s293
        %s295 = scalar_select %p294, %s289, %s293
        %p296 = scmp.lt.s32.totalorder %s295, 1
        %s297 = scalar_select %p296, %s295, 1
        %p298 = scmp.lt.s32.totalorder %s29, 0
        %s299 = scalar_select %p298, %s29, 0
        %s300 = sadd.s32 %s299, %s297
        %s301 = smul.addr %s300, 8
        %s302 = scalar_lea.vmem %s2, %s301
        %p303 = pneg %p129
        %p304 = pneg %p126
        %p305 = scmp.lt.s32.totalorder %s29, 0
        %s306 = scalar_select %p305, %s29, 0
        %s307 = scalar_lea.vmem %s3, %s306
        %p308 = pneg %p155
        %p309 = pneg %p152
        %p310 = pneg %p183
        %p311 = pneg %p180
        %s312 = sand.u32 %s170, 1
        %s313 = scalar_lea.sflag [#allocation9], %s312
        %s314 = sand.u32 %s170, 1
        %s315 = scalar_lea.vmem [#allocation10], %s314
        %s316 = sadd.s32 %s28, %s30
        %s317 = sld [smem:[#allocation6 + %s29]]
        %s318 = ssub.s32 %s317, 1
        %p319 = scmp.gt.s32.totalorder %s318, 0
        %s320 = scalar_select %p319, %s318, 0
        %p321 = scmp.lt.s32.totalorder %s316, %s320
        %s322 = scalar_select %p321, %s316, %s320
        %s323 = smul.u32 8, %s322
        %s324 = sadd.s32 %s28, %s30
        %s325 = sld [smem:[#allocation6 + %s29]]
        %s326 = ssub.s32 %s325, 1
        %p327 = scmp.gt.s32.totalorder %s326, 0
        %s328 = scalar_select %p327, %s326, 0
        %p329 = scmp.lt.s32.totalorder %s324, %s328
        %s330 = scalar_select %p329, %s324, %s328
        %p331 = scmp.lt.s32.totalorder %s330, 1
        %s332 = scalar_select %p331, %s330, 1
        %p333 = scmp.lt.s32.totalorder %s29, 0
        %s334 = scalar_select %p333, %s29, 0
        %s335 = sadd.s32 %s334, %s332
        %s336 = smul.addr %s335, 8
        %s337 = scalar_lea.vmem %s2, %s336
        %s338 = sadd.s32 %s28, %s30
        %s339 = sld [smem:[#allocation6 + %s29]]
        %s340 = ssub.s32 %s339, 1
        %p341 = scmp.gt.s32.totalorder %s340, 0
        %s342 = scalar_select %p341, %s340, 0
        %p343 = scmp.lt.s32.totalorder %s338, %s342
        %s344 = scalar_select %p343, %s338, %s342
        %p345 = scmp.lt.s32.totalorder %s29, 0
        %s346 = scalar_select %p345, %s29, 0
        %s347 = scalar_lea.vmem %s3, %s346
        %s348 = sadd.s32 %s28, %s30
        %s349 = sld [smem:[#allocation6 + %s29]]
        %p350 = scmp.lt.s32.totalorder %s348, %s349
        %p351 = scmp.eq.s32.totalorder %s30, 0
        %p352 = scmp.eq.s32.totalorder %s31, 0
        %p353 = pnand %p351, %p352
        %p354 = pneg %p353
        // Predicated region
        $region37: #{tpu_custom_call.1} parent=31 // pred_check
          _
        $region38: #{tpu_custom_call.1} parent=31 // pred_check_branch
          %356 = sbr.rel (%p353) target = $region40
        $region39: #{tpu_custom_call.1} parent=31 // pred_region
          %vm357 = vcmask 8192
          %358 = vst.msk [vmem:[%s315] sm:$0x1] %vm357, 0.0
        $region40: #{tpu_custom_call.1} parent=31 // pred_fallthru
          _
        %p359 = pnand %p350, %p352
        %p360 = pneg %p359
        // Predicated region
        $region41: #{tpu_custom_call.1} parent=31 // pred_check
          _
        $region42: #{tpu_custom_call.1} parent=31 // pred_check_branch
          %362 = sbr.rel (%p359) target = $region44
        $region43: #{tpu_custom_call.1} parent=31 // pred_region
          %vm363 = vcmask 15360
          %364 = vst.msk [vmem:[#allocation2] sm:$0xff] %vm363, -inf
          %365 = vst.msk [vmem:[#allocation3] sm:$0xff] %vm363, 0.0
          %366 = vst.msk [vmem:[#allocation4] sm:$0xff] %vm363, 0.0
        $region44: #{tpu_custom_call.1} parent=31 // pred_fallthru
          _
        // Predicated region
        $region45: #{tpu_custom_call.1} parent=31 // pred_check
          %p367 = pneg %p350
        $region46: #{tpu_custom_call.1} parent=31 // pred_check_branch
          %369 = sbr.rel (%p367) target = $region48
        $region47: #{tpu_custom_call.1} parent=31 // pred_region
          %v370 = vld [vmem:[%s276] sm:$0x3]
          %v371 = vld [vmem:[%s276 + $0x2] sm:$0x3]
          %v372 = vld [vmem:[%s276 + $0x4] sm:$0x3]
          %v373 = vld [vmem:[%s276 + $0x6] sm:$0x3]
          %v374 = vld [vmem:[%s276 + $0x8] sm:$0x3]
          %v375 = vld [vmem:[%s276 + $0xa] sm:$0x3]
          %v376 = vld [vmem:[%s276 + $0xc] sm:$0x3]
          %v377 = vld [vmem:[%s276 + $0xe] sm:$0x3]
          %v378 = vld [vmem:[%s337] sm:$0xff]
          %v379 = vlaneseq
          %v380 = vand.u32 %v379, 127
          %s381 = smul.u32 %s31, 128
          %s382 = ssub.s32 200, %s381
          %v383 = vstv %s382
          %vm384 = vcmp.lt.s32.totalorder %v380, %v383
          %v385 = vsel %vm384, %v370, -inf
          %v386 = vsel %vm384, %v371, -inf
          %v387 = vsel %vm384, %v372, -inf
          %v388 = vsel %vm384, %v373, -inf
          %v389 = vsel %vm384, %v374, -inf
          %v390 = vsel %vm384, %v375, -inf
          %v391 = vsel %vm384, %v376, -inf
          %v392 = vsel %vm384, %v377, -inf
          %v393 = vld [vmem:[#allocation2] sm:$0xff]
          %vm394 = vcmask 1041408
          %v395 = vsel %vm394, %v385, -inf
          %396 = vmax.xlane.f32.xlu0 %v395
          %v397 = vpop.xlane.xlu0 %396
          %v398 = vsel %vm394, %v386, -inf
          %399 = vmax.xlane.f32.xlu0 %v398
          %v400 = vpop.xlane.xlu0 %399
          %v401 = vsel %vm394, %v387, -inf
          %402 = vmax.xlane.f32.xlu0 %v401
          %v403 = vpop.xlane.xlu0 %402
          %v404 = vsel %vm394, %v388, -inf
          %405 = vmax.xlane.f32.xlu0 %v404
          %v406 = vpop.xlane.xlu0 %405
          %v407 = vsel %vm394, %v389, -inf
          %408 = vmax.xlane.f32.xlu0 %v407
          %v409 = vpop.xlane.xlu0 %408
          %v410 = vsel %vm394, %v390, -inf
          %411 = vmax.xlane.f32.xlu0 %v410
          %v412 = vpop.xlane.xlu0 %411
          %v413 = vsel %vm394, %v391, -inf
          %414 = vmax.xlane.f32.xlu0 %v413
          %v415 = vpop.xlane.xlu0 %414
          %v416 = vsel %vm394, %v392, -inf
          %417 = vmax.xlane.f32.xlu0 %v416
          %v418 = vpop.xlane.xlu0 %417
          %v427 = vperm.slane %v397, %v380
          %v428 = vperm.slane %v400, %v380
          %v429 = vperm.slane %v403, %v380
          %v430 = vperm.slane %v406, %v380
          %v431 = vperm.slane %v409, %v380
          %v432 = vperm.slane %v412, %v380
          %v433 = vperm.slane %v415, %v380
          %v434 = vperm.slane %v418, %v380
          %vm435 = vcmask 1041409
          %v436 = vsel %vm435, %v428, %v427
          %vm437 = vcmask 1042434
          %v438 = vsel %vm437, %v429, %v436
          %vm439 = vcmask 1043459
          %v440 = vsel %vm439, %v430, %v438
          %vm441 = vcmask 1044484
          %v442 = vsel %vm441, %v431, %v440
          %vm443 = vcmask 1045509
          %v444 = vsel %vm443, %v432, %v442
          %vm445 = vcmask 1046534
          %v446 = vsel %vm445, %v433, %v444
          %vm447 = vcmask 1047559
          %v448 = vsel %vm447, %v434, %v446
          %v450 = vmax.f32 %v393, %v448
          %v451 = vld [vmem:[#allocation3] sm:$0xff]
          %v452 = vsub.f32 %v393, %v450
          %v453 = vmul.f32 %v452, 1.442695
          %v454 = vpow.pop %v453
          %v455 = vmul.f32 %v451, %v454
          %v456 = vperm.slane %v450, 0
          %v457 = vlaneseq
          %v458 = vshrl.u32 %v457, 7
          %460 = vset.pattern.permute.xlu0 %v458
          %461 = vperm.xlu0 %460, %v456
          %v462 = vpop.permute.xlu0 %461
          %v463 = vperm.slane %v450, 1
          %v464 = vlaneseq
          %v465 = vshrl.u32 %v464, 7
          %467 = vset.pattern.permute.xlu0 %v465
          %468 = vperm.xlu0 %467, %v463
          %v469 = vpop.permute.xlu0 %468
          %v470 = vperm.slane %v450, 2
          %v471 = vlaneseq
          %v472 = vshrl.u32 %v471, 7
          %474 = vset.pattern.permute.xlu0 %v472
          %475 = vperm.xlu0 %474, %v470
          %v476 = vpop.permute.xlu0 %475
          %v477 = vperm.slane %v450, 3
          %v478 = vlaneseq
          %v479 = vshrl.u32 %v478, 7
          %481 = vset.pattern.permute.xlu0 %v479
          %482 = vperm.xlu0 %481, %v477
          %v483 = vpop.permute.xlu0 %482
          %v484 = vperm.slane %v450, 4
          %v485 = vlaneseq
          %v486 = vshrl.u32 %v485, 7
          %488 = vset.pattern.permute.xlu0 %v486
          %489 = vperm.xlu0 %488, %v484
          %v490 = vpop.permute.xlu0 %489
          %v491 = vperm.slane %v450, 5
          %v492 = vlaneseq
          %v493 = vshrl.u32 %v492, 7
          %495 = vset.pattern.permute.xlu0 %v493
          %496 = vperm.xlu0 %495, %v491
          %v497 = vpop.permute.xlu0 %496
          %v498 = vperm.slane %v450, 6
          %v499 = vlaneseq
          %v500 = vshrl.u32 %v499, 7
          %502 = vset.pattern.permute.xlu0 %v500
          %503 = vperm.xlu0 %502, %v498
          %v504 = vpop.permute.xlu0 %503
          %v505 = vperm.slane %v450, 7
          %v506 = vlaneseq
          %v507 = vshrl.u32 %v506, 7
          %509 = vset.pattern.permute.xlu0 %v507
          %510 = vperm.xlu0 %509, %v505
          %v511 = vpop.permute.xlu0 %510
          %v512 = vsub.f32 %v385, %v462
          %v513 = vsub.f32 %v386, %v469
          %v514 = vsub.f32 %v387, %v476
          %v515 = vsub.f32 %v388, %v483
          %v516 = vsub.f32 %v389, %v490
          %v517 = vsub.f32 %v390, %v497
          %v518 = vsub.f32 %v391, %v504
          %v519 = vsub.f32 %v392, %v511
          %v520 = vmul.f32 %v512, 1.442695
          %v521 = vpow.pop %v520
          %v522 = vmul.f32 %v513, 1.442695
          %v523 = vpow.pop %v522
          %v524 = vmul.f32 %v514, 1.442695
          %v525 = vpow.pop %v524
          %v526 = vmul.f32 %v515, 1.442695
          %v527 = vpow.pop %v526
          %v528 = vmul.f32 %v516, 1.442695
          %v529 = vpow.pop %v528
          %v530 = vmul.f32 %v517, 1.442695
          %v531 = vpow.pop %v530
          %v532 = vmul.f32 %v518, 1.442695
          %v533 = vpow.pop %v532
          %v534 = vmul.f32 %v519, 1.442695
          %v535 = vpow.pop %v534
          %v536 = vsel %vm394, %v521, 0.0
          %537 = vadd.xlane.f32.xlu0 %v536
          %v538 = vpop.xlane.xlu0 %537
          %v539 = vsel %vm394, %v523, 0.0
          %540 = vadd.xlane.f32.xlu0 %v539
          %v541 = vpop.xlane.xlu0 %540
          %v542 = vsel %vm394, %v525, 0.0
          %543 = vadd.xlane.f32.xlu0 %v542
          %v544 = vpop.xlane.xlu0 %543
          %v545 = vsel %vm394, %v527, 0.0
          %546 = vadd.xlane.f32.xlu0 %v545
          %v547 = vpop.xlane.xlu0 %546
          %v548 = vsel %vm394, %v529, 0.0
          %549 = vadd.xlane.f32.xlu0 %v548
          %v550 = vpop.xlane.xlu0 %549
          %v551 = vsel %vm394, %v531, 0.0
          %552 = vadd.xlane.f32.xlu0 %v551
          %v553 = vpop.xlane.xlu0 %552
          %v554 = vsel %vm394, %v533, 0.0
          %555 = vadd.xlane.f32.xlu0 %v554
          %v556 = vpop.xlane.xlu0 %555
          %v557 = vsel %vm394, %v535, 0.0
          %558 = vadd.xlane.f32.xlu0 %v557
          %v559 = vpop.xlane.xlu0 %558
          %v568 = vperm.slane %v538, %v380
          %v569 = vperm.slane %v541, %v380
          %v570 = vperm.slane %v544, %v380
          %v571 = vperm.slane %v547, %v380
          %v572 = vperm.slane %v550, %v380
          %v573 = vperm.slane %v553, %v380
          %v574 = vperm.slane %v556, %v380
          %v575 = vperm.slane %v559, %v380
          %v576 = vsel %vm435, %v569, %v568
          %v577 = vsel %vm437, %v570, %v576
          %v578 = vsel %vm439, %v571, %v577
          %v579 = vsel %vm441, %v572, %v578
          %v580 = vsel %vm443, %v573, %v579
          %v581 = vsel %vm445, %v574, %v580
          %v582 = vsel %vm447, %v575, %v581
          %v584 = vadd.f32 %v455, %v582
          %vm585 = vcmask 15360
          %586 = vst.msk [vmem:[#allocation3] sm:$0xff] %vm585, %v584
          %587 = vst.msk [vmem:[#allocation2] sm:$0xff] %vm585, %v450
          %v588 = vstv %s381
          %v589 = vsub.s32 %v378, %v588
          %v590 = vperm.slane %v589, 0
          %v591 = vlaneseq
          %v592 = vshrl.u32 %v591, 7
          %594 = vset.pattern.permute.xlu0 %v592
          %595 = vperm.xlu0 %594, %v590
          %v596 = vpop.permute.xlu0 %595
          %v597 = vperm.slane %v589, 1
          %v598 = vlaneseq
          %v599 = vshrl.u32 %v598, 7
          %601 = vset.pattern.permute.xlu0 %v599
          %602 = vperm.xlu0 %601, %v597
          %v603 = vpop.permute.xlu0 %602
          %v604 = vperm.slane %v589, 2
          %v605 = vlaneseq
          %v606 = vshrl.u32 %v605, 7
          %608 = vset.pattern.permute.xlu0 %v606
          %609 = vperm.xlu0 %608, %v604
          %v610 = vpop.permute.xlu0 %609
          %v611 = vperm.slane %v589, 3
          %v612 = vlaneseq
          %v613 = vshrl.u32 %v612, 7
          %615 = vset.pattern.permute.xlu0 %v613
          %616 = vperm.xlu0 %615, %v611
          %v617 = vpop.permute.xlu0 %616
          %v618 = vperm.slane %v589, 4
          %v619 = vlaneseq
          %v620 = vshrl.u32 %v619, 7
          %622 = vset.pattern.permute.xlu0 %v620
          %623 = vperm.xlu0 %622, %v618
          %v624 = vpop.permute.xlu0 %623
          %v625 = vperm.slane %v589, 5
          %v626 = vlaneseq
          %v627 = vshrl.u32 %v626, 7
          %629 = vset.pattern.permute.xlu0 %v627
          %630 = vperm.xlu0 %629, %v625
          %v631 = vpop.permute.xlu0 %630
          %v632 = vperm.slane %v589, 6
          %v633 = vlaneseq
          %v634 = vshrl.u32 %v633, 7
          %636 = vset.pattern.permute.xlu0 %v634
          %637 = vperm.xlu0 %636, %v632
          %v638 = vpop.permute.xlu0 %637
          %v639 = vperm.slane %v589, 7
          %v640 = vlaneseq
          %v641 = vshrl.u32 %v640, 7
          %643 = vset.pattern.permute.xlu0 %v641
          %644 = vperm.xlu0 %643, %v639
          %v645 = vpop.permute.xlu0 %644
          %vm646 = vcmp.eq.s32.totalorder %v380, %v596
          %vm647 = vcmp.eq.s32.totalorder %v380, %v603
          %vm648 = vcmp.eq.s32.totalorder %v380, %v610
          %vm649 = vcmp.eq.s32.totalorder %v380, %v617
          %vm650 = vcmp.eq.s32.totalorder %v380, %v624
          %vm651 = vcmp.eq.s32.totalorder %v380, %v631
          %vm652 = vcmp.eq.s32.totalorder %v380, %v638
          %vm653 = vcmp.eq.s32.totalorder %v380, %v645
          %v654 = vsel %vm646, %v385, 0.0
          %v655 = vsel %vm647, %v386, 0.0
          %v656 = vsel %vm648, %v387, 0.0
          %v657 = vsel %vm649, %v388, 0.0
          %v658 = vsel %vm650, %v389, 0.0
          %v659 = vsel %vm651, %v390, 0.0
          %v660 = vsel %vm652, %v391, 0.0
          %v661 = vsel %vm653, %v392, 0.0
          %v662 = vld [vmem:[#allocation4] sm:$0xff]
          %v663 = vsel %vm394, %v654, 0.0
          %664 = vadd.xlane.f32.xlu0 %v663
          %v665 = vpop.xlane.xlu0 %664
          %v666 = vsel %vm394, %v655, 0.0
          %667 = vadd.xlane.f32.xlu0 %v666
          %v668 = vpop.xlane.xlu0 %667
          %v669 = vsel %vm394, %v656, 0.0
          %670 = vadd.xlane.f32.xlu0 %v669
          %v671 = vpop.xlane.xlu0 %670
          %v672 = vsel %vm394, %v657, 0.0
          %673 = vadd.xlane.f32.xlu0 %v672
          %v674 = vpop.xlane.xlu0 %673
          %v675 = vsel %vm394, %v658, 0.0
          %676 = vadd.xlane.f32.xlu0 %v675
          %v677 = vpop.xlane.xlu0 %676
          %v678 = vsel %vm394, %v659, 0.0
          %679 = vadd.xlane.f32.xlu0 %v678
          %v680 = vpop.xlane.xlu0 %679
          %v681 = vsel %vm394, %v660, 0.0
          %682 = vadd.xlane.f32.xlu0 %v681
          %v683 = vpop.xlane.xlu0 %682
          %v684 = vsel %vm394, %v661, 0.0
          %685 = vadd.xlane.f32.xlu0 %v684
          %v686 = vpop.xlane.xlu0 %685
          %v695 = vperm.slane %v665, %v380
          %v696 = vperm.slane %v668, %v380
          %v697 = vperm.slane %v671, %v380
          %v698 = vperm.slane %v674, %v380
          %v699 = vperm.slane %v677, %v380
          %v700 = vperm.slane %v680, %v380
          %v701 = vperm.slane %v683, %v380
          %v702 = vperm.slane %v686, %v380
          %v703 = vsel %vm435, %v696, %v695
          %v704 = vsel %vm437, %v697, %v703
          %v705 = vsel %vm439, %v698, %v704
          %v706 = vsel %vm441, %v699, %v705
          %v707 = vsel %vm443, %v700, %v706
          %v708 = vsel %vm445, %v701, %v707
          %v709 = vsel %vm447, %v702, %v708
          %v711 = vadd.f32 %v662, %v709
          %712 = vst.msk [vmem:[#allocation4] sm:$0xff] %vm585, %v711
        $region48: #{tpu_custom_call.1} parent=31 // pred_fallthru
          _
        %p713 = scmp.eq.s32.totalorder %s31, 1
        %p714 = pnand %p350, %p713
        %p715 = pneg %p714
        // Predicated region
        $region49: #{tpu_custom_call.1} parent=31 // pred_check
          _
        $region50: #{tpu_custom_call.1} parent=31 // pred_check_branch
          %717 = sbr.rel (%p714) target = $region52
        $region51: #{tpu_custom_call.1} parent=31 // pred_region
          %v718 = vld [vmem:[%s337] sm:$0xff]
          %v719 = vld [vmem:[#allocation2] sm:$0xff]
          %v720 = vld [vmem:[#allocation3] sm:$0xff]
          %v721 = vlog2.pop %v720
          %v722 = vmul.f32 %v721, 0.6931472
          %v723 = vadd.f32 %v719, %v722
          %v724 = vld [vmem:[#allocation4] sm:$0xff]
          %v725 = vsub.f32 %v723, %v724
          %vm726 = vcmp.eq.s32.totalorder %v718, 4294967196
          %v727 = vsel %vm726, 0.0, %v725
          %v728 = vlaneseq
          %v729 = vshrl.u32 %v728, 7
          %s730 = smul.u32 %s348, 8
          %v731 = vstv %s730
          %v732 = vadd.s32 %v729, %v731
          %v733 = vld [vmem:[%s347] sm:$0x1]
          %v734 = vperm.slane %v733, 0
          %vm735 = vcmp.lt.s32.totalorder %v732, %v734
          %v736 = vsel %vm735, %v727, 0.0
          %v737 = vld [vmem:[%s315] sm:$0x1]
          %vm738 = vcmask 15360
          %v739 = vsel %vm738, %v736, 0.0
          %v740 = vrot.slane %v739, 4
          %v741 = vadd.f32 %v739, %v740
          %v742 = vrot.slane %v741, 2
          %v743 = vadd.f32 %v741, %v742
          %v744 = vrot.slane %v743, 1
          %v745 = vadd.f32 %v743, %v744
          %v746 = vadd.f32 %v737, %v745
          %vm747 = vcmask 8192
          %748 = vst.msk [vmem:[%s315] sm:$0x1] %vm747, %v746
        $region52: #{tpu_custom_call.1} parent=31 // pred_fallthru
          _
        %s749 = sand.u32 %s170, 1
        %s750 = scalar_lea.sflag [#allocation9], %s749
        %s751 = sand.u32 %s170, 1
        %s752 = scalar_lea.vmem [#allocation10], %s751
        // Predicated region
        $region53: #{tpu_custom_call.1} parent=31 // pred_check
          %p753 = pneg %p180
        $region54: #{tpu_custom_call.1} parent=31 // pred_check_branch
          %755 = sbr.rel (%p753) target = $region56
        $region55: #{tpu_custom_call.1} parent=31 // pred_region
          %757 = vsyncadd %s750, 0
          %s758 = sadd.s32 %s29, %s28
          %s759 = scalar_lea.hbm %s4, %s758
          %s761 = sshll.u32 %s752, 4
          %s762 = int_to_ptr.vmem [resolvable:$true] %s761
          %s763 = sshll.u32 %s759, 4
          %s764 = int_to_ptr.hbm [resolvable:$true] %s763
          %766 = dma.vmem_to_hbm [thread:$0]  %s762, 16, %s764, %s750
        $region56: #{tpu_custom_call.1} parent=31 // pred_fallthru
          _
      $region32: #{tpu_custom_call.1} parent=5 // pred_fallthru
        _
      %p767 = scmp.le.s32.totalorder 2, %s17
      // Predicated region
      $region57: #{tpu_custom_call.1} parent=5 // pred_check
        %p768 = pneg %p767
      $region58: #{tpu_custom_call.1} parent=5 // pred_check_branch
        %770 = sbr.rel (%p768) target = $region60
      $region59: #{tpu_custom_call.1} parent=5 // pred_region
        %s771 = ssub.s32 %s17, 2
        // Predicated region
        $region61: #{tpu_custom_call.1} parent=59 // pred_check
          %p772 = pneg %p186
        $region62: #{tpu_custom_call.1} parent=59 // pred_check_branch
          %774 = sbr.rel (%p772) target = $region64
        $region63: #{tpu_custom_call.1} parent=59 // pred_region
          %s775 = sand.u32 %s171, 1
          %s776 = scalar_lea.sflag [#allocation9], %s775
          %s777 = sand.u32 %s171, 1
          %s778 = scalar_lea.vmem [#allocation10], %s777
          %780 = dma.done %s776, 16
        $region64: #{tpu_custom_call.1} parent=59 // pred_fallthru
          _
      $region60: #{tpu_custom_call.1} parent=5 // pred_fallthru
        _
    $region6: #{tpu_custom_call.1} parent=1 // loop_footer
      %s21 = sadd.s32 1, %s17
    $region7: #{tpu_custom_call.1} parent=1 // loop_footer_branch
      %16 = sbr.rel target = $region3
    $region8: #{tpu_custom_call.1} parent=1 // loop_exit
      _
    %781 = vsyncpa [#allocation8], 1
    %s782 = scalar_lea.sflag [#allocation8], 1
    %783 = vsyncpa %s782, 1
    %784 = vsyncpa [#allocation9], 1
    %s785 = scalar_lea.sflag [#allocation9], 1
    %786 = vsyncpa %s785, 1

</llo_original>
